<compile_context>
chip_gen: v6e
topology: v6e:2x2x1
jax: 0.10.0
libtpu: 0.0.40
codegen_flags: <defaults>
</compile_context>

<pallas_src>
import functools

import jax
import jax.numpy as jnp
from jax.experimental import pallas as pl
from jax.experimental.pallas import tpu as pltpu


# ------------------------------ small helpers -------------------------------

def _round_up(x, m):
    return (x + m - 1) // m * m


def _pick_tile(total, cap, quantum):
    """Largest multiple of `quantum` <= cap that divides `total` (total % quantum == 0)."""
    assert total % quantum == 0, (total, quantum)
    t = min(cap, total)
    t = max(quantum, t - t % quantum)
    while total % t:
        t -= quantum
    return t


def _pad2(x, rows, cols):
    x = x.astype(jnp.float32)
    return jnp.pad(x, ((0, rows - x.shape[0]), (0, cols - x.shape[1])))


def _pad_row(v, cols):
    v = v.astype(jnp.float32)
    return jnp.pad(v, (0, cols - v.shape[0])).reshape(1, cols)


@functools.lru_cache(maxsize=1)
def _vmem_limit_bytes():
    """Generation-aware VMEM cap: v7x has 64 MiB/TC, v5e/v6e have 128 MiB."""
    default = 64 * 1024 * 1024
    try:
        info = pltpu.get_tpu_info()
        cap = int(getattr(info, "vmem_capacity_bytes", default))
    except Exception:  # no TPU info available -> conservative default
        cap = default
    # Leave headroom for compiler scratch; never below 32 MB, never above 100 MB.
    return max(32 * 1024 * 1024, min(cap * 3 // 4, 100 * 1024 * 1024))


# ----------------------------- Pallas kernels ------------------------------

def matmul_bias_kernel(x_ref, w_ref, b_ref, o_ref):
    """o = x @ w + b  (w already stored (Din, Dout); lane-dense output)."""
    acc = jnp.dot(x_ref[...], w_ref[...], preferred_element_type=jnp.float32)
    o_ref[...] = (acc + b_ref[...]).astype(o_ref.dtype)


def _gcn_prop_kernel_resident(tk, adj_ref, xw_ref, b_ref, alpha_ref, o_ref, acc_ref):
    """prelu(adj @ xw + b, alpha) with xw RESIDENT in VMEM (fetched once).

    Grid = (row_tiles, k_tiles); k is the reduction axis ("arbitrary").
    xw_ref is the full (Np, D) slab; we slice the k-th (tk, D) chunk in-kernel.
    Bias + PReLU applied once in the k == last finalize; bf16 output.
    """
    k = pl.program_id(1)

    @pl.when(k == 0)
    def _():
        acc_ref[...] = jnp.zeros_like(acc_ref)

    start = pl.multiple_of(k * tk, 128)
    acc_ref[...] += jnp.dot(adj_ref[...], xw_ref[pl.ds(start, tk), :],
                            preferred_element_type=jnp.float32)

    @pl.when(k == pl.num_programs(1) - 1)
    def _():
        h = acc_ref[...] + b_ref[...]
        o_ref[...] = jnp.where(h > 0, h, alpha_ref[...] * h).astype(o_ref.dtype)


def _gcn_prop_kernel_slab(adj_ref, xw_ref, b_ref, alpha_ref, o_ref, acc_ref):
    """Fallback when xw does not fit VMEM: xw streamed as (tk, D) slabs."""
    k = pl.program_id(1)

    @pl.when(k == 0)
    def _():
        acc_ref[...] = jnp.zeros_like(acc_ref)

    acc_ref[...] += jnp.dot(adj_ref[...], xw_ref[...],
                            preferred_element_type=jnp.float32)

    @pl.when(k == pl.num_programs(1) - 1)
    def _():
        h = acc_ref[...] + b_ref[...]
        o_ref[...] = jnp.where(h > 0, h, alpha_ref[...] * h).astype(o_ref.dtype)


# ------------------------------ JAX wrappers --------------------------------

def matmul_bias(x, w, b, *, out_dtype=jnp.float32, tile_rows=512):
    """x: (M, K), w: (K, Dout), b: (1, Dout) -> (M, Dout). Dims pre-padded by caller."""
    M, K = x.shape
    Dout = w.shape[1]
    # quantum 16: native bf16 packed tile is (16, 128) rows x lanes.
    tm = _pick_tile(M, tile_rows, 16)
    return pl.pallas_call(
        matmul_bias_kernel,
        out_shape=jax.ShapeDtypeStruct((M, Dout), out_dtype),
        grid=(M // tm,),
        in_specs=[
            pl.BlockSpec((tm, K), lambda i: (i, 0)),
            pl.BlockSpec((K, Dout), lambda i: (0, 0)),
            pl.BlockSpec((1, Dout), lambda i: (0, 0)),
        ],
        out_specs=pl.BlockSpec((tm, Dout), lambda i: (i, 0)),
        compiler_params=pltpu.CompilerParams(
            dimension_semantics=("parallel",),
            vmem_limit_bytes=_vmem_limit_bytes(),
        ),
    )(x, w, b)


def gcn_propagate(adj, xw, b, alpha_row, *, tile_m=512, tile_k=1024,
                  out_dtype=jnp.bfloat16):
    """prelu(adj @ xw + b, alpha).  adj: (Np, Np) bf16, xw: (Np, D) bf16 -> (Np, D) bf16."""
    Np = adj.shape[0]
    D = xw.shape[1]
    vmem = _vmem_limit_bytes()

    tm = _pick_tile(Np, tile_m, 128)
    # Prefer an even number of row tiles so v7x's two TensorCores stay balanced
    # on the "parallel" row axis (near-zero impact on single-TC v5e/v6e).
    if (Np // tm) % 2 == 1 and tm % 256 == 0:
        tm //= 2
    tk = _pick_tile(Np, tile_k, 128)

    xw_bytes = xw.size * xw.dtype.itemsize
    adj_tile_bytes = tm * tk * adj.dtype.itemsize
    acc_out_bytes = tm * D * 4 + 2 * tm * D * jnp.dtype(out_dtype).itemsize
    # Keep xw resident (fetched ONCE: constant index_map) when the working set
    # (2x buffered xw + 2x adj tile + acc + out) fits comfortably in VMEM.
    resident = (2 * xw_bytes + 2 * adj_tile_bytes + acc_out_bytes) <= vmem * 3 // 4

    if resident:
        kernel = functools.partial(_gcn_prop_kernel_resident, tk)
        xw_spec = pl.BlockSpec((Np, D), lambda i, k: (0, 0))
        xw_traffic = xw_bytes
    else:
        kernel = _gcn_prop_kernel_slab
        xw_spec = pl.BlockSpec((tk, D), lambda i, k: (k, 0))
        xw_traffic = xw_bytes * (Np // tm)   # re-read once per row tile

    bytes_accessed = (adj.size * adj.dtype.itemsize
                      + xw_traffic
                      + Np * D * jnp.dtype(out_dtype).itemsize)

    return pl.pallas_call(
        kernel,
        out_shape=jax.ShapeDtypeStruct((Np, D), out_dtype),
        grid=(Np // tm, Np // tk),
        in_specs=[
            pl.BlockSpec((tm, tk), lambda i, k: (i, k)),   # adj tile (dominant stream)
            xw_spec,                                       # resident slab or k-slab
            pl.BlockSpec((1, D), lambda i, k: (0, 0)),     # bias row
            pl.BlockSpec((1, D), lambda i, k: (0, 0)),     # PReLU slope broadcast row
        ],
        out_specs=pl.BlockSpec((tm, D), lambda i, k: (i, 0)),
        scratch_shapes=[pltpu.VMEM((tm, D), jnp.float32)],
        compiler_params=pltpu.CompilerParams(
            dimension_semantics=("parallel", "arbitrary"),
            vmem_limit_bytes=vmem,
        ),
        cost_estimate=pl.CostEstimate(
            flops=2 * Np * Np * D,
            transcendentals=0,
            bytes_accessed=bytes_accessed,
        ),
    )(adj, xw, b, alpha_row)


def prepare_adj(adj):
    """One-time per-graph layout plumbing: pad to 128-multiples + bf16 cast.

    Hoisted out of dgi_forward so a static adjacency is padded/cast once,
    not on every forward call.
    """
    N = adj.shape[0]
    Np = _round_up(N, 128)
    # TODO(synk): on v7x, an fp8(e4m3) adj path could halve adj HBM traffic, but
    # the 1/deg normalization makes it numerically risky; left at bf16.
    return _pad2(adj, Np, Np).astype(jnp.bfloat16)


def dgi_forward(features, seq1, adj_p, params):
    """params = (b1, W1, a1, b2, W2, a2, Wc, bc) — same ordering as named_parameters().

    adj_p must be the output of prepare_adj(adj) (padded, bf16, row-normalized dense).
    """
    b1, w1, a1, b2, w2, a2, wc, bc = params
    N, n_in = features.shape
    n_h1, n_h2, n_way = w1.shape[0], w2.shape[0], wc.shape[0]

    Np = adj_p.shape[0]
    assert Np == _round_up(N, 128) and adj_p.dtype == jnp.bfloat16

    Din = _round_up(n_in, 128)
    D1 = _round_up(n_h1, 128)
    D2 = _round_up(n_h2, 128)
    Dc = _round_up(n_way, 128)

    bf16 = jnp.bfloat16
    f32 = jnp.float32

    # One-time layout plumbing: zero-pad to lane-dense widths, pre-transpose weights,
    # cast MXU operands to bf16 (f32 accumulation stays inside the kernels).
    x_p = _pad2(features, Np, Din).astype(bf16)

    w1_t = _pad2(w1.T, Din, D1).astype(bf16)   # (Din, D1)
    w2_t = _pad2(w2.T, D1, D2).astype(bf16)    # (D1, D2)
    wc_t = _pad2(wc.T, D2, Dc).astype(bf16)    # (D2, Dc)

    b1_p = _pad_row(b1, D1)
    b2_p = _pad_row(b2, D2)
    bc_p = _pad_row(bc, Dc)
    a1_row = jnp.full((1, D1), a1[0], f32)
    a2_row = jnp.full((1, D2), a2[0], f32)
    zero1 = jnp.zeros((1, D1), f32)
    zero2 = jnp.zeros((1, D2), f32)

    # ---- layer 0: h1 = prelu(adj @ (x @ W1.T) + b1, a1)
    xw1 = matmul_bias(x_p, w1_t, zero1, out_dtype=bf16)        # (Np, D1) bf16
    h1 = gcn_propagate(adj_p, xw1, b1_p, a1_row)               # (Np, D1) bf16

    # ---- layer 1: h2 = prelu(adj @ (h1 @ W2.T) + b2, a2)
    xw2 = matmul_bias(h1, w2_t, zero2, out_dtype=bf16)         # no extra cast pass
    h2 = gcn_propagate(adj_p, xw2, b2_p, a2_row)               # (Np, D2) bf16

    # ---- gather + classifier head (row gather = plain JAX glue)
    out = jnp.take(h2, seq1, axis=0)                           # (Q, D2) bf16
    Q = out.shape[0]
    Qp = _round_up(Q, 16)                                      # bf16 (16,128) tile
    out_p = jnp.pad(out, ((0, Qp - Q), (0, 0)))
    logits_p = matmul_bias(out_p, wc_t, bc_p, out_dtype=f32)   # (Qp, Dc)
    return logits_p[:Q, :n_way]


# ------------------------------ reference -----------------------------------

def dgi_forward_ref(features, seq1, adj, params):
    b1, w1, a1, b2, w2, a2, wc, bc = params

    def prelu(x, a):
        return jnp.where(x > 0, x, a[0] * x)

    h = prelu(adj @ (features @ w1.T) + b1, a1)
    h = prelu(adj @ (h @ w2.T) + b2, a2)
    out = h[seq1]
    return out @ wc.T + bc


# --------------------------------- main --------------------------------------

if __name__ == "__main__":
    # Small shapes consistent with the module.
    N, n_in, n_h1, n_h2, n_way = 16, 8, 32, 16, 4
    n_query = 8

    key = jax.random.PRNGKey(0)
    ks = jax.random.split(key, 10)

    features = jax.random.normal(ks[0], (N, n_in), dtype=jnp.float32)

    # Row-normalized dense adjacency (self-loops included).
    adj_raw = (jax.random.uniform(ks[1], (N, N)) > 0.7).astype(jnp.float32)
    adj_raw = adj_raw + jnp.eye(N, dtype=jnp.float32)
    adj = adj_raw / jnp.sum(adj_raw, axis=1, keepdims=True)

    seq1 = jax.random.randint(ks[2], (n_query,), 0, N)

    # Deterministic parameter init (GCN1: bias, weight, prelu; GCN2: same; cls: W, b).
    b1 = jnp.zeros((n_h1,), jnp.float32)
    w1 = 0.1 * jax.random.normal(ks[3], (n_h1, n_in), dtype=jnp.float32)
    a1 = jnp.full((1,), 0.25, jnp.float32)
    b2 = jnp.zeros((n_h2,), jnp.float32)
    w2 = 0.1 * jax.random.normal(ks[4], (n_h2, n_h1), dtype=jnp.float32)
    a2 = jnp.full((1,), 0.25, jnp.float32)
    wc = 0.1 * jax.random.normal(ks[5], (n_way, n_h2), dtype=jnp.float32)
    bc = 0.01 * jax.random.normal(ks[6], (n_way,), dtype=jnp.float32)

    params = (b1, w1, a1, b2, w2, a2, wc, bc)

    # Per-graph prep done ONCE (hoisted out of the forward).
    adj_p = prepare_adj(adj)
    adj_p = jax.block_until_ready(adj_p)

    logits = dgi_forward(features, seq1, adj_p, params)
    logits = jax.block_until_ready(logits)

    ref = dgi_forward_ref(features, seq1, adj, params)
    assert logits.shape == (n_query, n_way)
    # bf16 MXU operands / bf16 intermediates with f32 accumulation -> loosened tolerance.
    assert jnp.allclose(logits, ref, atol=2e-2, rtol=2e-2), "mismatch vs reference"

    print("KERNEL_OK")
</pallas_src>

<mosaic_0001>
module attributes {stable_mosaic.version = 11 : i64} {
  func.func @matmul_bias_kernel(%arg0: i32, %arg1: memref<128x128xbf16, #tpu.memory_space<vmem>>, %arg2: memref<128x128xbf16, #tpu.memory_space<vmem>>, %arg3: memref<1x128xf32, #tpu.memory_space<vmem>>, %arg4: memref<128x128xbf16, #tpu.memory_space<vmem>>) attributes {dimension_semantics = [#tpu.dimension_semantics<parallel>], iteration_bounds = array<i64: 1>, scalar_prefetch = 0 : i64, scratch_operands = 0 : i64, tpu.core_type = #tpu.core_type<tc>, window_params = [{transform_indices = @transform_0, window_bounds = array<i64: 128, 128>}, {pipeline_mode = #tpu.pipeline_mode<synchronous>, transform_indices = @transform_1, window_bounds = array<i64: 128, 128>}, {pipeline_mode = #tpu.pipeline_mode<synchronous>, transform_indices = @transform_2, window_bounds = array<i64: 1, 128>}, {transform_indices = @transform_3, window_bounds = array<i64: 128, 128>}]} {
    %c0 = arith.constant 0 : index
    %c0_0 = arith.constant 0 : index
    %0 = vector.load %arg1[%c0, %c0_0] : memref<128x128xbf16, #tpu.memory_space<vmem>>, vector<128x128xbf16>
    %c0_1 = arith.constant 0 : index
    %c0_2 = arith.constant 0 : index
    %1 = vector.load %arg2[%c0_1, %c0_2] : memref<128x128xbf16, #tpu.memory_space<vmem>>, vector<128x128xbf16>
    %cst = arith.constant dense<0.000000e+00> : vector<128x128xf32>
    %2 = tpu.matmul %0, %1, %cst {dimension_numbers = #tpu.dot_dimension_numbers<[1], [0], [0], [1], [0, 0, 1, 1], [], []>} : vector<128x128xbf16>, vector<128x128xbf16>, vector<128x128xf32> -> vector<128x128xf32>
    %c0_3 = arith.constant 0 : index
    %c0_4 = arith.constant 0 : index
    %3 = vector.load %arg3[%c0_3, %c0_4] : memref<1x128xf32, #tpu.memory_space<vmem>>, vector<1x128xf32>
    %4 = vector.broadcast %3 : vector<1x128xf32> to vector<128x128xf32>
    %5 = arith.addf %2, %4 : vector<128x128xf32>
    %6 = arith.truncf %5 : vector<128x128xf32> to vector<128x128xbf16>
    %c0_5 = arith.constant 0 : index
    %c0_6 = arith.constant 0 : index
    %7 = vector.load %arg4[%c0_5, %c0_6] : memref<128x128xbf16, #tpu.memory_space<vmem>>, vector<128x128xbf16>
    tpu.vector_store %arg4[%c0_5, %c0_6], %6 {strides = array<i32>} : memref<128x128xbf16, #tpu.memory_space<vmem>>, vector<128x128xbf16>,
    return
  }
  func.func @transform_0(%arg0: i32) -> (i32, i32) {
    %c0_i32 = arith.constant 0 : i32
    %c0_i32_0 = arith.constant 0 : i32
    return %arg0, %c0_i32 : i32, i32
  }
  func.func @transform_1(%arg0: i32) -> (i32, i32) {
    %c0_i32 = arith.constant 0 : i32
    %c0_i32_0 = arith.constant 0 : i32
    %c0_i32_1 = arith.constant 0 : i32
    return %c0_i32, %c0_i32_0 : i32, i32
  }
  func.func @transform_2(%arg0: i32) -> (i32, i32) {
    %c0_i32 = arith.constant 0 : i32
    %c0_i32_0 = arith.constant 0 : i32
    %c0_i32_1 = arith.constant 0 : i32
    return %c0_i32, %c0_i32_0 : i32, i32
  }
  func.func @transform_3(%arg0: i32) -> (i32, i32) {
    %c0_i32 = arith.constant 0 : i32
    %c0_i32_0 = arith.constant 0 : i32
    return %arg0, %c0_i32 : i32, i32
  }
}

</mosaic_0001>

<llo_original>
// kernel: tpu_custom_call.1
$region0: #{tpu_custom_call.1}
  #allocation0 [shape = 'u32[]', space=smem, size = 0x4, offset = 0x4, fixed_abs, tag = 'smem constant byte address 0x4 - core index']
  #allocation1 [shape = 'u32[144,128]{1,0:T(1,128)}', space=vmem, size = 0x12000, scoped, tag = 'internal scratch']
  %s0 = inlined_call_operand.hbm [shape: bf16[128,128], index: 0, kind: input, shape index: {}]
  %s1 = inlined_call_operand.hbm [shape: bf16[128,128], index: 1, kind: input, shape index: {}]
  %s2 = inlined_call_operand.vmem [shape: f32[1,128], index: 2, kind: input, shape index: {}]
  %s3 = inlined_call_operand.hbm [shape: bf16[128,128], index: 3, kind: output, shape index: {}]
  %s4 = sld [smem:[#allocation0]]
  $region30: #{tpu_custom_call.1} parent=0
    _
  %s6 = ssub.s32 1, %s4
  %s7 = scalar_select 0, %s6, %s4
  $region1: #{tpu_custom_call.1} parent=0
    #allocation2 [shape = 'u8[32768]{0}', space=vmem, size = 0x8000, scoped, tag = 'input window, operand 0, single buffered']
    #allocation3 [shape = 's32[1]{0}', space=sflag, size = 0x4, scoped, tag = 'scoped memory for tpu_custom_call.1']
    #allocation4 [shape = 's32[1]{0}', space=sflag, size = 0x4, scoped, tag = 'scoped memory for tpu_custom_call.1']
    #allocation5 [shape = 'u8[32768]{0}', space=vmem, size = 0x8000, scoped, tag = 'input window, operand 1, single buffered']
    #allocation6 [shape = 's32[1]{0}', space=sflag, size = 0x4, scoped, tag = 'scoped memory for tpu_custom_call.1']
    #allocation7 [shape = 'u8[32768]{0}', space=vmem, size = 0x8000, scoped, tag = 'output window, operand 0, single buffered']
    %8 = vsyncpa [#allocation3], 0
    %9 = vsyncpa [#allocation6], 0
    %10 = vsyncpa [#allocation4], 0
    // Predicated region
    $region2: #{tpu_custom_call.1} parent=1 // pred_check
      _
    $region3: #{tpu_custom_call.1} parent=1 // pred_check_branch
      %12 = sbr.rel (0) target = $region5
    $region4: #{tpu_custom_call.1} parent=1 // pred_region
      %s14 = ssub.s32 1024, 1024
      %15 = vsyncadd [#allocation3], %s14
      %s16 = sshll.u32 [#allocation2], 4
      %s17 = int_to_ptr.vmem [resolvable:$true] %s16
      %22 = dma.hbm_to_vmem [thread:$0]  %s0, 1024, %s17, [#allocation3], 64, 64, 4
    $region5: #{tpu_custom_call.1} parent=1 // pred_fallthru
      _
    // Predicated region
    $region6: #{tpu_custom_call.1} parent=1 // pred_check
      _
    $region7: #{tpu_custom_call.1} parent=1 // pred_check_branch
      %24 = sbr.rel (0) target = $region9
    $region8: #{tpu_custom_call.1} parent=1 // pred_region
      %s26 = ssub.s32 1024, 1024
      %27 = vsyncadd [#allocation6], %s26
      %s28 = sshll.u32 [#allocation5], 4
      %s29 = int_to_ptr.vmem [resolvable:$true] %s28
      %34 = dma.hbm_to_vmem [thread:$0]  %s1, 1024, %s29, [#allocation6], 64, 64, 4
    $region9: #{tpu_custom_call.1} parent=1 // pred_fallthru
      _
    // Predicated region
    $region10: #{tpu_custom_call.1} parent=1 // pred_check
      _
    $region11: #{tpu_custom_call.1} parent=1 // pred_check_branch
      %36 = sbr.rel (0) target = $region13
    $region12: #{tpu_custom_call.1} parent=1 // pred_region
      _
    $region13: #{tpu_custom_call.1} parent=1 // pred_fallthru
      _
    // Predicated region
    $region14: #{tpu_custom_call.1} parent=1 // pred_check
      _
    $region15: #{tpu_custom_call.1} parent=1 // pred_check_branch
      %38 = sbr.rel (0) target = $region17
    $region16: #{tpu_custom_call.1} parent=1 // pred_region
      %39 = dma.done [#allocation3], 1024
    $region17: #{tpu_custom_call.1} parent=1 // pred_fallthru
      _
    // Predicated region
    $region18: #{tpu_custom_call.1} parent=1 // pred_check
      _
    $region19: #{tpu_custom_call.1} parent=1 // pred_check_branch
      %41 = sbr.rel (0) target = $region21
    $region20: #{tpu_custom_call.1} parent=1 // pred_region
      %42 = dma.done [#allocation6], 1024
    $region21: #{tpu_custom_call.1} parent=1 // pred_fallthru
      _
    %v44 = vld [vmem:[#allocation2] sm:$0xf]
    %v45 = vld [vmem:[#allocation2 + $0x4] sm:$0xf]
    %v46 = vld [vmem:[#allocation2 + $0x8] sm:$0xf]
    %v47 = vld [vmem:[#allocation2 + $0xc] sm:$0xf]
    %v48 = vld [vmem:[#allocation2 + $0x10] sm:$0xf]
    %v49 = vld [vmem:[#allocation2 + $0x14] sm:$0xf]
    %v50 = vld [vmem:[#allocation2 + $0x18] sm:$0xf]
    %v51 = vld [vmem:[#allocation2 + $0x1c] sm:$0xf]
    %v52 = vld [vmem:[#allocation2 + $0x20] sm:$0xf]
    %v53 = vld [vmem:[#allocation2 + $0x24] sm:$0xf]
    %v54 = vld [vmem:[#allocation2 + $0x28] sm:$0xf]
    %v55 = vld [vmem:[#allocation2 + $0x2c] sm:$0xf]
    %v56 = vld [vmem:[#allocation2 + $0x30] sm:$0xf]
    %v57 = vld [vmem:[#allocation2 + $0x34] sm:$0xf]
    %v58 = vld [vmem:[#allocation2 + $0x38] sm:$0xf]
    %v59 = vld [vmem:[#allocation2 + $0x3c] sm:$0xf]
    %v60 = vld [vmem:[#allocation5] sm:$0xf]
    %v61 = vld [vmem:[#allocation5 + $0x4] sm:$0xf]
    %v62 = vld [vmem:[#allocation5 + $0x8] sm:$0xf]
    %v63 = vld [vmem:[#allocation5 + $0xc] sm:$0xf]
    %v64 = vld [vmem:[#allocation5 + $0x10] sm:$0xf]
    %v65 = vld [vmem:[#allocation5 + $0x14] sm:$0xf]
    %v66 = vld [vmem:[#allocation5 + $0x18] sm:$0xf]
    %v67 = vld [vmem:[#allocation5 + $0x1c] sm:$0xf]
    %v68 = vld [vmem:[#allocation5 + $0x20] sm:$0xf]
    %v69 = vld [vmem:[#allocation5 + $0x24] sm:$0xf]
    %v70 = vld [vmem:[#allocation5 + $0x28] sm:$0xf]
    %v71 = vld [vmem:[#allocation5 + $0x2c] sm:$0xf]
    %v72 = vld [vmem:[#allocation5 + $0x30] sm:$0xf]
    %v73 = vld [vmem:[#allocation5 + $0x34] sm:$0xf]
    %v74 = vld [vmem:[#allocation5 + $0x38] sm:$0xf]
    %v75 = vld [vmem:[#allocation5 + $0x3c] sm:$0xf]
    %v76 = vld [vmem:[%s2] sm:$0x1]
    %v78 = vlaneseq
    %v79 = vshrl.u32 %v78, 7
    %v80 = vsub.s32 0, %v79
    %v81 = vrot.slane %v76, %v80
    %v99 = vunpack.c.l.b16 %v44
    %v100 = vunpack.c.l.b16 %v45
    %v101 = vunpack.c.l.b16 %v46
    %v102 = vunpack.c.l.b16 %v47
    %v103 = vunpack.c.l.b16 %v48
    %v104 = vunpack.c.l.b16 %v49
    %v105 = vunpack.c.l.b16 %v50
    %v106 = vunpack.c.l.b16 %v51
    %v107 = vunpack.c.l.b16 %v52
    %v108 = vunpack.c.l.b16 %v53
    %v109 = vunpack.c.l.b16 %v54
    %v110 = vunpack.c.l.b16 %v55
    %v111 = vunpack.c.l.b16 %v56
    %v112 = vunpack.c.l.b16 %v57
    %v113 = vunpack.c.l.b16 %v58
    %v114 = vunpack.c.l.b16 %v59
    %v115 = vpack.c.b16 %v100, %v99
    %v116 = vpack.c.b16 %v102, %v101
    %v117 = vpack.c.b16 %v104, %v103
    %v118 = vpack.c.b16 %v106, %v105
    %v119 = vpack.c.b16 %v108, %v107
    %v120 = vpack.c.b16 %v110, %v109
    %v121 = vpack.c.b16 %v112, %v111
    %v122 = vpack.c.b16 %v114, %v113
    %v147 = vunpack.c.l.b16 %v60
    %v148 = vunpack.c.l.b16 %v61
    %v149 = vunpack.c.l.b16 %v62
    %v150 = vunpack.c.l.b16 %v63
    %v151 = vunpack.c.l.b16 %v64
    %v152 = vunpack.c.l.b16 %v65
    %v153 = vunpack.c.l.b16 %v66
    %v154 = vunpack.c.l.b16 %v67
    %v155 = vunpack.c.l.b16 %v68
    %v156 = vunpack.c.l.b16 %v69
    %v157 = vunpack.c.l.b16 %v70
    %v158 = vunpack.c.l.b16 %v71
    %v159 = vunpack.c.l.b16 %v72
    %v160 = vunpack.c.l.b16 %v73
    %v161 = vunpack.c.l.b16 %v74
    %v162 = vunpack.c.l.b16 %v75
    %v163 = vpack.c.b16 %v148, %v147
    %v164 = vpack.c.b16 %v150, %v149
    %v165 = vpack.c.b16 %v152, %v151
    %v166 = vpack.c.b16 %v154, %v153
    %v167 = vpack.c.b16 %v156, %v155
    %v168 = vpack.c.b16 %v158, %v157
    %v169 = vpack.c.b16 %v160, %v159
    %v170 = vpack.c.b16 %v162, %v161
    %179 = vmatprep.subr.bf16.mxu0 0
    %180 = vmatpush1.bf16.msra.mxu0 %v170
    %181 = vmatprep.subr.bf16.mxu0 0
    %182 = vmatpush1.bf16.msra.mxu0 %v169
    %183 = vmatprep.subr.bf16.mxu0 0
    %184 = vmatpush1.bf16.msra.mxu0 %v168
    %185 = vmatprep.subr.bf16.mxu0 0
    %186 = vmatpush1.bf16.msra.mxu0 %v167
    %187 = vmatprep.subr.bf16.mxu0 0
    %188 = vmatpush1.bf16.msra.mxu0 %v166
    %189 = vmatprep.subr.bf16.mxu0 0
    %190 = vmatpush1.bf16.msra.mxu0 %v165
    %191 = vmatprep.subr.bf16.mxu0 0
    %192 = vmatpush1.bf16.msra.mxu0 %v164
    %193 = vmatprep.subr.bf16.mxu0 0
    %194 = vmatpush1.bf16.msra.mxu0 %v163
    %195 = vmatprep.subr.bf16.mxu0 0
    %196 = vmatpush2.bf16.msra.mxu0 0
    %197 = vmatprep.subr.bf16.mxu0 0
    %198 = vmatpush2.bf16.msra.mxu0 0
    %199 = vmatprep.subr.bf16.mxu0 0
    %200 = vmatpush2.bf16.msra.mxu0 0
    %201 = vmatprep.subr.bf16.mxu0 0
    %202 = vmatpush2.bf16.msra.mxu0 0
    %203 = vmatprep.subr.bf16.mxu0 0
    %204 = vmatpush2.bf16.msra.mxu0 0
    %205 = vmatprep.subr.bf16.mxu0 0
    %206 = vmatpush2.bf16.msra.mxu0 0
    %207 = vmatprep.subr.bf16.mxu0 0
    %208 = vmatpush2.bf16.msra.mxu0 0
    %209 = vmatprep.subr.bf16.mxu0 0
    %210 = vmatpush2.bf16.msra.mxu0 0
    %211 = vmatprep.mubr.bf16.mxu0 0
    %212 = vmatmul.mubr.bf16.gmra.mxu0 %v115
    %v213 = vpop.f32.mrf.mxu0
    %v214 = vadd.f32 %v81, %v213
    %v215 = vpop.f32.mrf.mxu0
    %v216 = vpop.f32.mrf.mxu0
    %v217 = vadd.f32 %v81, %v216
    %v218 = vpop.f32.mrf.mxu0
    %219 = vmatprep.mubr.bf16.mxu0 0
    %220 = vmatmul.mubr.bf16.gmra.mxu0 %v116
    %v221 = vpop.f32.mrf.mxu0
    %v222 = vadd.f32 %v81, %v221
    %v223 = vpop.f32.mrf.mxu0
    %v224 = vpop.f32.mrf.mxu0
    %v225 = vadd.f32 %v81, %v224
    %v226 = vpop.f32.mrf.mxu0
    %227 = vmatprep.mubr.bf16.mxu0 0
    %228 = vmatmul.mubr.bf16.gmra.mxu0 %v117
    %v229 = vpop.f32.mrf.mxu0
    %v230 = vadd.f32 %v81, %v229
    %v231 = vpop.f32.mrf.mxu0
    %v232 = vpop.f32.mrf.mxu0
    %v233 = vadd.f32 %v81, %v232
    %v234 = vpop.f32.mrf.mxu0
    %235 = vmatprep.mubr.bf16.mxu0 0
    %236 = vmatmul.mubr.bf16.gmra.mxu0 %v118
    %v237 = vpop.f32.mrf.mxu0
    %v238 = vadd.f32 %v81, %v237
    %v239 = vpop.f32.mrf.mxu0
    %v240 = vpop.f32.mrf.mxu0
    %v241 = vadd.f32 %v81, %v240
    %v242 = vpop.f32.mrf.mxu0
    %243 = vmatprep.mubr.bf16.mxu0 0
    %244 = vmatmul.mubr.bf16.gmra.mxu0 %v119
    %v245 = vpop.f32.mrf.mxu0
    %v246 = vadd.f32 %v81, %v245
    %v247 = vpop.f32.mrf.mxu0
    %v248 = vpop.f32.mrf.mxu0
    %v249 = vadd.f32 %v81, %v248
    %v250 = vpop.f32.mrf.mxu0
    %251 = vmatprep.mubr.bf16.mxu0 0
    %252 = vmatmul.mubr.bf16.gmra.mxu0 %v120
    %v253 = vpop.f32.mrf.mxu0
    %v254 = vadd.f32 %v81, %v253
    %v255 = vpop.f32.mrf.mxu0
    %v256 = vpop.f32.mrf.mxu0
    %v257 = vadd.f32 %v81, %v256
    %v258 = vpop.f32.mrf.mxu0
    %259 = vmatprep.mubr.bf16.mxu0 0
    %260 = vmatmul.mubr.bf16.gmra.mxu0 %v121
    %v261 = vpop.f32.mrf.mxu0
    %v262 = vadd.f32 %v81, %v261
    %v263 = vpop.f32.mrf.mxu0
    %v264 = vpop.f32.mrf.mxu0
    %v265 = vadd.f32 %v81, %v264
    %v266 = vpop.f32.mrf.mxu0
    %267 = vmatprep.mubr.bf16.mxu0 0
    %268 = vmatmul.mubr.bf16.gmra.mxu0 %v122
    %v269 = vpop.f32.mrf.mxu0
    %v270 = vadd.f32 %v81, %v269
    %v271 = vpop.f32.mrf.mxu0
    %v272 = vpop.f32.mrf.mxu0
    %v273 = vadd.f32 %v81, %v272
    %v274 = vpop.f32.mrf.mxu0
    %275 = vdwg.mxu0
    %v276 = vpack.c.bf16 %v217, %v214
    %v277 = vpack.c.bf16 %v225, %v222
    %v278 = vpack.c.bf16 %v233, %v230
    %v279 = vpack.c.bf16 %v241, %v238
    %v280 = vpack.c.bf16 %v249, %v246
    %v281 = vpack.c.bf16 %v257, %v254
    %v282 = vpack.c.bf16 %v265, %v262
    %v283 = vpack.c.bf16 %v273, %v270
    %v292 = vunpack.c.l.b16 %v276
    %v293 = vunpack.c.h.b16 %v276
    %v294 = vunpack.c.l.b16 %v277
    %v295 = vunpack.c.h.b16 %v277
    %v296 = vunpack.c.l.b16 %v278
    %v297 = vunpack.c.h.b16 %v278
    %v298 = vunpack.c.l.b16 %v279
    %v299 = vunpack.c.h.b16 %v279
    %v300 = vunpack.c.l.b16 %v280
    %v301 = vunpack.c.h.b16 %v280
    %v302 = vunpack.c.l.b16 %v281
    %v303 = vunpack.c.h.b16 %v281
    %v304 = vunpack.c.l.b16 %v282
    %v305 = vunpack.c.h.b16 %v282
    %v306 = vunpack.c.l.b16 %v283
    %v307 = vunpack.c.h.b16 %v283
    %v308 = vpack.c.b16 %v292, %v292
    %v309 = vpack.c.b16 %v293, %v293
    %v310 = vpack.c.b16 %v294, %v294
    %v311 = vpack.c.b16 %v295, %v295
    %v312 = vpack.c.b16 %v296, %v296
    %v313 = vpack.c.b16 %v297, %v297
    %v314 = vpack.c.b16 %v298, %v298
    %v315 = vpack.c.b16 %v299, %v299
    %v316 = vpack.c.b16 %v300, %v300
    %v317 = vpack.c.b16 %v301, %v301
    %v318 = vpack.c.b16 %v302, %v302
    %v319 = vpack.c.b16 %v303, %v303
    %v320 = vpack.c.b16 %v304, %v304
    %v321 = vpack.c.b16 %v305, %v305
    %v322 = vpack.c.b16 %v306, %v306
    %v323 = vpack.c.b16 %v307, %v307
    %340 = vst [vmem:[#allocation7] sm:$0xf] %v308
    %341 = vst [vmem:[#allocation7 + $0x4] sm:$0xf] %v309
    %342 = vst [vmem:[#allocation7 + $0x8] sm:$0xf] %v310
    %343 = vst [vmem:[#allocation7 + $0xc] sm:$0xf] %v311
    %344 = vst [vmem:[#allocation7 + $0x10] sm:$0xf] %v312
    %345 = vst [vmem:[#allocation7 + $0x14] sm:$0xf] %v313
    %346 = vst [vmem:[#allocation7 + $0x18] sm:$0xf] %v314
    %347 = vst [vmem:[#allocation7 + $0x1c] sm:$0xf] %v315
    %348 = vst [vmem:[#allocation7 + $0x20] sm:$0xf] %v316
    %349 = vst [vmem:[#allocation7 + $0x24] sm:$0xf] %v317
    %350 = vst [vmem:[#allocation7 + $0x28] sm:$0xf] %v318
    %351 = vst [vmem:[#allocation7 + $0x2c] sm:$0xf] %v319
    %352 = vst [vmem:[#allocation7 + $0x30] sm:$0xf] %v320
    %353 = vst [vmem:[#allocation7 + $0x34] sm:$0xf] %v321
    %354 = vst [vmem:[#allocation7 + $0x38] sm:$0xf] %v322
    %355 = vst [vmem:[#allocation7 + $0x3c] sm:$0xf] %v323
    // Predicated region
    $region22: #{tpu_custom_call.1} parent=1 // pred_check
      _
    $region23: #{tpu_custom_call.1} parent=1 // pred_check_branch
      %357 = sbr.rel (0) target = $region25
    $region24: #{tpu_custom_call.1} parent=1 // pred_region
      %s359 = ssub.s32 1024, 1024
      %360 = vsyncadd [#allocation4], %s359
      %s361 = sshll.u32 [#allocation7], 4
      %s362 = int_to_ptr.vmem [resolvable:$true] %s361
      %367 = dma.vmem_to_hbm [thread:$0]  %s362, 1024, %s3, [#allocation4], 64, 64, 4
    $region25: #{tpu_custom_call.1} parent=1 // pred_fallthru
      _
    // Predicated region
    $region26: #{tpu_custom_call.1} parent=1 // pred_check
      _
    $region27: #{tpu_custom_call.1} parent=1 // pred_check_branch
      %369 = sbr.rel (0) target = $region29
    $region28: #{tpu_custom_call.1} parent=1 // pred_region
      %370 = dma.done [#allocation4], 1024
    $region29: #{tpu_custom_call.1} parent=1 // pred_fallthru
      _
    %371 = vsyncpa [#allocation3], 1
    %372 = vsyncpa [#allocation6], 1
    %373 = vsyncpa [#allocation4], 1

</llo_original>
